<compile_context>
chip_gen: v7x
topology: tpu7x:2x2x1
jax: 0.10.0
libtpu: 0.0.40
codegen_flags: <defaults>
</compile_context>

<pallas_src>
import functools

import jax
import jax.numpy as jnp
from jax import lax
from jax.experimental import pallas as pl
from jax.experimental.pallas import tpu as pltpu


def _round_up(x, m):
    return ((x + m - 1) // m) * m


def _cdiv(a, b):
    return (a + b - 1) // b


def _gplinear_kernel(x_ref, w_ref, o_ref, *, tk, k_total, num_k, mask_k,
                     w_resident):
    """One (batch-tile, K-tile) step of y^T = W @ x^T (bias added in wrapper).

    x_ref : (tb, tk)              batch rows x loci (contraction) columns
    w_ref : (n_phen, K_pad | tk)  full resident weight, or one K tile of it
    o_ref : (n_phen, tb)          lane-dense f32 output; block index constant
                                  across k, so it doubles as the accumulator
    """
    k = pl.program_id(1)

    @pl.when(k == 0)
    def _():
        o_ref[...] = jnp.zeros_like(o_ref)

    x = x_ref[...]
    if mask_k:
        # Ragged K: the last K tile reads past n_loci (unspecified data). Zero
        # the tail lanes before the contraction. Only emitted when K % tk != 0;
        # the (compare+select) is VPU work fully hidden under the x DMA.
        rem = k_total - k * tk
        lane = lax.broadcasted_iota(jnp.int32, x.shape, 1)
        x = jnp.where(lane < rem, x, 0.0)

    if w_resident and num_k > 1:
        start = k * tk
        if tk % 128 == 0:
            start = pl.multiple_of(start, 128)
        w = w_ref[:, pl.ds(start, tk)]
    else:
        w = w_ref[...]

    # NT contraction directly on the MXU: (n_phen, tk) . (tb, tk) over the
    # shared loci axis -> (n_phen, tb). No transpose materialized in VMEM.
    o_ref[...] += lax.dot_general(
        w, x,
        dimension_numbers=(((1,), (1,)), ((), ())),
        preferred_element_type=jnp.float32,
    )


def gplinear_forward(x, weight, bias, *, tb=1024, tk=2048):
    """y = x @ weight.T + bias (PyTorch nn.Linear semantics) via Pallas TPU."""
    B, K = x.shape
    n_phen, K_w = weight.shape
    assert K == K_w and bias.shape == (n_phen,)

    # --- batch tile (lane axis of the (n_phen, tb) output block) ------------
    if B < 128:
        tb_eff = B                      # single block == full dim (always legal)
    else:
        # Multiple of 128 so lane-dense output stores are unmasked; capped at
        # ceil(B/2) so there are >= 2 batch tiles for the v7x megacore split.
        half = _round_up(_cdiv(B, 2), 128)
        tb_eff = max(128, min(tb, half))
    num_b = _cdiv(B, tb_eff)

    # --- contraction tile ----------------------------------------------------
    tk = max(128, (tk // 128) * 128)
    if K <= tk:
        tk_eff = K                      # single K tile == full dim, no masking
    else:
        tk_eff = tk
        if K % tk_eff != 0:
            # Prefer a >= tk/2 multiple of 128 that divides K exactly (no mask).
            for cand in range(tk, tk // 2 - 1, -128):
                if K % cand == 0:
                    tk_eff = cand
                    break
    num_k = _cdiv(K, tk_eff)
    mask_k = (K % tk_eff) != 0

    # W is tiny (n_phen rows): keep it fully VMEM-resident when it fits, so it
    # is DMA'd once rather than per grid step. Zero-pad its K axis to a tile
    # multiple so the in-kernel slice stays in bounds (cheap: n_phen rows).
    # x itself is NEVER padded / copied in HBM.
    K_pad = num_k * tk_eff
    w_arr = weight if K_pad == K else jnp.pad(weight, ((0, 0), (0, K_pad - K)))
    w_resident = (n_phen * K_pad * 4) <= (4 << 20)
    if w_resident:
        w_spec = pl.BlockSpec((n_phen, K_pad), lambda i, k: (0, 0))
    else:
        w_spec = pl.BlockSpec((n_phen, tk_eff), lambda i, k: (0, k))

    kernel = functools.partial(
        _gplinear_kernel, tk=tk_eff, k_total=K, num_k=num_k,
        mask_k=mask_k, w_resident=w_resident)

    flops = 2 * B * K * n_phen
    bytes_accessed = int(x.nbytes) + int(w_arr.nbytes) + 4 * n_phen * B

    out_t = pl.pallas_call(
        kernel,
        out_shape=jax.ShapeDtypeStruct((n_phen, B), jnp.float32),
        grid=(num_b, num_k),
        in_specs=[
            pl.BlockSpec((tb_eff, tk_eff), lambda i, k: (i, k)),   # x tile
            w_spec,                                                # weight
        ],
        out_specs=pl.BlockSpec((n_phen, tb_eff), lambda i, k: (0, i)),
        compiler_params=pltpu.CompilerParams(
            dimension_semantics=("parallel", "arbitrary"),
            # 2 x 8 MiB x buffers + <= 8 MiB resident W + tiny out: fits v7x's
            # 64 MiB/TC and overrides v5e's 16 MiB scoped default.
            vmem_limit_bytes=40 * 1024 * 1024,
        ),
        cost_estimate=pl.CostEstimate(
            flops=flops, transcendentals=0, bytes_accessed=bytes_accessed),
    )(x, w_arr)

    # (n_phen, B) -> (B, n_phen); the bias add fuses into this tiny epilogue.
    return out_t.T + bias


if __name__ == "__main__":
    key = jax.random.PRNGKey(0)

    # ---- primary (toy) case: marker_n = 16 -> n_loci = 32, n_phen = 2 ------
    marker_n = 16
    n_loci = int(marker_n) * 2
    n_phen = 2
    batch = 8

    kx, kw, kb, kx2, kw2, kb2 = jax.random.split(key, 6)
    x = jax.random.normal(kx, (batch, n_loci), dtype=jnp.float32)
    bound = 1.0 / float(n_loci) ** 0.5
    weight = jax.random.uniform(kw, (n_phen, n_loci), jnp.float32, -bound, bound)
    bias = jax.random.uniform(kb, (n_phen,), jnp.float32, -bound, bound)

    y = jax.block_until_ready(gplinear_forward(x, weight, bias))
    y_ref = jnp.dot(x, weight.T, precision=lax.Precision.HIGHEST) + bias
    assert y.shape == (batch, n_loci and n_phen)
    assert jnp.allclose(y, y_ref, atol=1e-4, rtol=1e-4)

    # ---- secondary case exercising the tiled / ragged-K / batch-edge path --
    B2, K2 = 200, 2500   # 200 % 128 != 0, 2500 % 2048 != 0 -> masked K tail
    x2 = jax.random.normal(kx2, (B2, K2), dtype=jnp.float32)
    b2 = 1.0 / float(K2) ** 0.5
    w2 = jax.random.uniform(kw2, (n_phen, K2), jnp.float32, -b2, b2)
    bias2 = jax.random.uniform(kb2, (n_phen,), jnp.float32, -b2, b2)

    y2 = jax.block_until_ready(gplinear_forward(x2, w2, bias2))
    y2_ref = jnp.dot(x2, w2.T, precision=lax.Precision.HIGHEST) + bias2
    assert y2.shape == (B2, n_phen)
    assert jnp.allclose(y2, y2_ref, atol=2e-4, rtol=2e-4)

    print("KERNEL_OK")
</pallas_src>

<mosaic_0001>
module attributes {stable_mosaic.version = 11 : i64} {
  func.func @_gplinear_kernel(%arg0: i32, %arg1: i32, %arg2: memref<8x32xf32, #tpu.memory_space<vmem>>, %arg3: memref<2x32xf32, #tpu.memory_space<vmem>>, %arg4: memref<2x8xf32, #tpu.memory_space<vmem>>) attributes {dimension_semantics = [#tpu.dimension_semantics<parallel>, #tpu.dimension_semantics<arbitrary>], iteration_bounds = array<i64: 1, 1>, scalar_prefetch = 0 : i64, scratch_operands = 0 : i64, tpu.core_type = #tpu.core_type<tc>, window_params = [{transform_indices = @transform_0, window_bounds = array<i64: 8, 32>}, {pipeline_mode = #tpu.pipeline_mode<synchronous>, transform_indices = @transform_1, window_bounds = array<i64: 2, 32>}, {transform_indices = @transform_2, window_bounds = array<i64: 2, 8>}]} {
    %c0_i32 = arith.constant 0 : i32
    %0 = arith.cmpi eq, %arg1, %c0_i32 : i32
    %1 = arith.extui %0 : i1 to i32
    %c0_i32_0 = arith.constant 0 : i32
    %2 = arith.cmpi ne, %1, %c0_i32_0 : i32
    scf.if %2 {
      %cst_8 = arith.constant 0.000000e+00 : f32
      %9 = vector.broadcast %cst_8 : f32 to vector<2x8xf32>
      %c0_9 = arith.constant 0 : index
      %c0_10 = arith.constant 0 : index
      %10 = vector.load %arg4[%c0_9, %c0_10] : memref<2x8xf32, #tpu.memory_space<vmem>>, vector<2x8xf32>
      tpu.vector_store %arg4[%c0_9, %c0_10], %9 {strides = array<i32>} : memref<2x8xf32, #tpu.memory_space<vmem>>, vector<2x8xf32>,
    } else {
    }
    %c0 = arith.constant 0 : index
    %c0_1 = arith.constant 0 : index
    %3 = vector.load %arg2[%c0, %c0_1] : memref<8x32xf32, #tpu.memory_space<vmem>>, vector<8x32xf32>
    %c0_2 = arith.constant 0 : index
    %c0_3 = arith.constant 0 : index
    %4 = vector.load %arg3[%c0_2, %c0_3] : memref<2x32xf32, #tpu.memory_space<vmem>>, vector<2x32xf32>
    %c0_4 = arith.constant 0 : index
    %c0_5 = arith.constant 0 : index
    %5 = vector.load %arg4[%c0_4, %c0_5] : memref<2x8xf32, #tpu.memory_space<vmem>>, vector<2x8xf32>
    %cst = arith.constant dense<0.000000e+00> : vector<2x8xf32>
    %6 = tpu.matmul %4, %3, %cst {dimension_numbers = #tpu.dot_dimension_numbers<[1], [1], [0], [0], [0, 0, 1, 0], [], []>} : vector<2x32xf32>, vector<8x32xf32>, vector<2x8xf32> -> vector<2x8xf32>
    %7 = arith.addf %5, %6 : vector<2x8xf32>
    %c0_6 = arith.constant 0 : index
    %c0_7 = arith.constant 0 : index
    %8 = vector.load %arg4[%c0_6, %c0_7] : memref<2x8xf32, #tpu.memory_space<vmem>>, vector<2x8xf32>
    tpu.vector_store %arg4[%c0_6, %c0_7], %7 {strides = array<i32>} : memref<2x8xf32, #tpu.memory_space<vmem>>, vector<2x8xf32>,
    return
  }
  func.func @transform_0(%arg0: i32, %arg1: i32) -> (i32, i32) {
    %c0_i32 = arith.constant 0 : i32
    return %arg0, %arg1 : i32, i32
  }
  func.func @transform_1(%arg0: i32, %arg1: i32) -> (i32, i32) {
    %c0_i32 = arith.constant 0 : i32
    %c0_i32_0 = arith.constant 0 : i32
    %c0_i32_1 = arith.constant 0 : i32
    return %c0_i32, %c0_i32_0 : i32, i32
  }
  func.func @transform_2(%arg0: i32, %arg1: i32) -> (i32, i32) {
    %c0_i32 = arith.constant 0 : i32
    %c0_i32_0 = arith.constant 0 : i32
    return %c0_i32, %arg0 : i32, i32
  }
}

</mosaic_0001>

<llo_original>
// kernel: tpu_custom_call.1
$region0: #{tpu_custom_call.1}
  #allocation0 [shape = 'u32[]', space=smem, size = 0x4, offset = 0x4, fixed_abs, tag = 'smem constant byte address 0x4 - core index']
  #allocation1 [shape = 'u32[144,128]{1,0:T(1,128)}', space=vmem, size = 0x12000, scoped, tag = 'internal scratch']
  %s0 = inlined_call_operand.hbm [shape: f32[8,32], index: 0, kind: input, shape index: {}]
  %s1 = inlined_call_operand.vmem [shape: f32[2,32], index: 1, kind: input, shape index: {}]
  %s2 = inlined_call_operand.hbm [shape: f32[2,8], index: 2, kind: output, shape index: {}]
  %s3 = sld [smem:[#allocation0]]
  $region26: #{tpu_custom_call.1} parent=0
    _
  %s5 = ssub.s32 1, %s3
  %s6 = scalar_select 0, %s5, %s3
  $region1: #{tpu_custom_call.1} parent=0
    #allocation2 [shape = 'u8[4096]{0}', space=vmem, size = 0x1000, scoped, tag = 'input window, operand 0, single buffered']
    #allocation3 [shape = 's32[1]{0}', space=sflag, size = 0x4, scoped, tag = 'scoped memory for tpu_custom_call.1']
    #allocation4 [shape = 's32[1]{0}', space=sflag, size = 0x4, scoped, tag = 'scoped memory for tpu_custom_call.1']
    #allocation5 [shape = 'u8[1024]{0}', space=vmem, size = 0x400, scoped, tag = 'output window, operand 0, single buffered']
    %7 = vsyncpa [#allocation3], 0
    %8 = vsyncpa [#allocation4], 0
    // Predicated region
    $region2: #{tpu_custom_call.1} parent=1 // pred_check
      _
    $region3: #{tpu_custom_call.1} parent=1 // pred_check_branch
      %10 = sbr.rel (0) target = $region5
    $region4: #{tpu_custom_call.1} parent=1 // pred_region
      %s12 = ssub.s32 128, 128
      %13 = vsyncadd [#allocation3], %s12
      %s15 = sshll.u32 [#allocation2], 4
      %s16 = int_to_ptr.vmem [resolvable:$true] %s15
      %18 = dma.hbm_to_vmem [thread:$0]  %s0, 128, %s16, [#allocation3]
    $region5: #{tpu_custom_call.1} parent=1 // pred_fallthru
      _
    // Predicated region
    $region6: #{tpu_custom_call.1} parent=1 // pred_check
      _
    $region7: #{tpu_custom_call.1} parent=1 // pred_check_branch
      %20 = sbr.rel (0) target = $region9
    $region8: #{tpu_custom_call.1} parent=1 // pred_region
      _
    $region9: #{tpu_custom_call.1} parent=1 // pred_fallthru
      _
    // Predicated region
    $region10: #{tpu_custom_call.1} parent=1 // pred_check
      _
    $region11: #{tpu_custom_call.1} parent=1 // pred_check_branch
      %22 = sbr.rel (0) target = $region13
    $region12: #{tpu_custom_call.1} parent=1 // pred_region
      %23 = dma.done [#allocation3], 128
    $region13: #{tpu_custom_call.1} parent=1 // pred_fallthru
      _
    %p24 = scmp.eq.s32.totalorder 0, 0
    // Predicated region
    $region14: #{tpu_custom_call.1} parent=1 // pred_check
      %p25 = pneg %p24
    $region15: #{tpu_custom_call.1} parent=1 // pred_check_branch
      %27 = sbr.rel (%p25) target = $region17
    $region16: #{tpu_custom_call.1} parent=1 // pred_region
      %vm28 = vcmask 58368
      %29 = vst.msk [vmem:[#allocation5] sm:$0x3] %vm28, 0.0
    $region17: #{tpu_custom_call.1} parent=1 // pred_fallthru
      _
    %v30 = vld [vmem:[#allocation2] sm:$0xff]
    %v31 = vld [vmem:[%s1] sm:$0x3]
    %v32 = vld [vmem:[#allocation5] sm:$0x3]
    %vm33 = vcmask 261120
    %v35 = vsel %vm33, %v31, 0
    %v38 = vsel %vm33, %v30, 0
    %40 = vmatprep.subr.mxu0 0.0
    %41 = vmatpush1.xpose.msra.mxu0 %v38
    %42 = vmatprep.subr.mxu0 0.0
    %43 = vmatpush1.xpose.msra.mxu0 0.0
    %44 = vmatprep.subr.mxu0 0.0
    %45 = vmatpush1.xpose.msra.mxu0 0.0
    %46 = vmatprep.subr.mxu0 0.0
    %47 = vmatpush1.xpose.msra.mxu0 0.0
    %48 = vmatprep.subr.mxu0 0.0
    %49 = vmatpush1.xpose.msra.mxu0 0.0
    %50 = vmatprep.subr.mxu0 0.0
    %51 = vmatpush1.xpose.msra.mxu0 0.0
    %52 = vmatprep.subr.mxu0 0.0
    %53 = vmatpush1.xpose.msra.mxu0 0.0
    %54 = vmatprep.subr.mxu0 0.0
    %55 = vmatpush1.xpose.msra.mxu0 0.0
    %56 = vmatprep.subr.mxu0 0.0
    %57 = vmatpush1.xpose.msra.mxu0 0.0
    %58 = vmatprep.subr.mxu0 0.0
    %59 = vmatpush1.xpose.msra.mxu0 0.0
    %60 = vmatprep.subr.mxu0 0.0
    %61 = vmatpush1.xpose.msra.mxu0 0.0
    %62 = vmatprep.subr.mxu0 0.0
    %63 = vmatpush1.xpose.msra.mxu0 0.0
    %64 = vmatprep.subr.mxu0 0.0
    %65 = vmatpush1.xpose.msra.mxu0 0.0
    %66 = vmatprep.subr.mxu0 0.0
    %67 = vmatpush1.xpose.msra.mxu0 0.0
    %68 = vmatprep.subr.mxu0 0.0
    %69 = vmatpush1.xpose.msra.mxu0 0.0
    %70 = vmatprep.subr.mxu0 0.0
    %71 = vmatpush1.xpose.msra.mxu0 0.0
    %72 = vmatprep.subr.mxu0 0.0
    %73 = vmatpush1.xpose.msra.mxu0 0.0
    %74 = vmatprep.subr.mxu0 0.0
    %75 = vmatpush1.xpose.msra.mxu0 0.0
    %76 = vmatprep.subr.mxu0 0.0
    %77 = vmatpush1.xpose.msra.mxu0 0.0
    %78 = vmatprep.subr.mxu0 0.0
    %79 = vmatpush1.xpose.msra.mxu0 0.0
    %80 = vmatprep.subr.mxu0 0.0
    %81 = vmatpush1.xpose.msra.mxu0 0.0
    %82 = vmatprep.subr.mxu0 0.0
    %83 = vmatpush1.xpose.msra.mxu0 0.0
    %84 = vmatprep.subr.mxu0 0.0
    %85 = vmatpush1.xpose.msra.mxu0 0.0
    %86 = vmatprep.subr.mxu0 0.0
    %87 = vmatpush1.xpose.msra.mxu0 0.0
    %88 = vmatprep.subr.mxu0 0.0
    %89 = vmatpush1.xpose.msra.mxu0 0.0
    %90 = vmatprep.subr.mxu0 0.0
    %91 = vmatpush1.xpose.msra.mxu0 0.0
    %92 = vmatprep.subr.mxu0 0.0
    %93 = vmatpush1.xpose.msra.mxu0 0.0
    %94 = vmatprep.subr.mxu0 0.0
    %95 = vmatpush1.xpose.msra.mxu0 0.0
    %96 = vmatprep.subr.mxu0 0.0
    %97 = vmatpush1.xpose.msra.mxu0 0.0
    %98 = vmatprep.subr.mxu0 0.0
    %99 = vmatpush1.xpose.msra.mxu0 0.0
    %100 = vmatprep.subr.mxu0 0.0
    %101 = vmatpush1.xpose.msra.mxu0 0.0
    %102 = vmatprep.subr.mxu0 0.0
    %103 = vmatpush1.xpose.msra.mxu0 0.0
    %104 = vmatprep.mubr.f32.mxu0 0.0
    %105 = vmatmul.mubr.f32.gmra.mrb[0].mxu0 %v35
    %v106 = vpop.f32.mrb[0].mxu0
    %v107 = vadd.f32 0.0, %v106
    %v108 = vpop.f32.mrb[0].mxu0
    %109 = vdwg.mxu0
    %v110 = vadd.f32 %v32, %v107
    %vm111 = vcmask 58368
    %112 = vst.msk [vmem:[#allocation5] sm:$0x3] %vm111, %v110
    // Predicated region
    $region18: #{tpu_custom_call.1} parent=1 // pred_check
      _
    $region19: #{tpu_custom_call.1} parent=1 // pred_check_branch
      %114 = sbr.rel (0) target = $region21
    $region20: #{tpu_custom_call.1} parent=1 // pred_region
      %s116 = ssub.s32 32, 32
      %117 = vsyncadd [#allocation4], %s116
      %s119 = sshll.u32 [#allocation5], 4
      %s120 = int_to_ptr.vmem [resolvable:$true] %s119
      %122 = dma.vmem_to_hbm [thread:$0]  %s120, 32, %s2, [#allocation4]
    $region21: #{tpu_custom_call.1} parent=1 // pred_fallthru
      _
    // Predicated region
    $region22: #{tpu_custom_call.1} parent=1 // pred_check
      _
    $region23: #{tpu_custom_call.1} parent=1 // pred_check_branch
      %124 = sbr.rel (0) target = $region25
    $region24: #{tpu_custom_call.1} parent=1 // pred_region
      %125 = dma.done [#allocation4], 32
    $region25: #{tpu_custom_call.1} parent=1 // pred_fallthru
      _
    %126 = vsyncpa [#allocation3], 1
    %127 = vsyncpa [#allocation4], 1

</llo_original>
